<compile_context>
chip_gen: v5e
topology: v5e:2x2
jax: 0.10.0
libtpu: 0.0.40
codegen_flags: <defaults>
</compile_context>

<pallas_src>
import math

import jax
import jax.numpy as jnp
from jax.experimental import pallas as pl
from jax.experimental.pallas import tpu as pltpu


def _add_pe_kernel(x_ref, pe_ref, o_ref):
    # x_ref:  (batch, TILE_F) tile of the flattened input
    # pe_ref: (1, TILE_F)     same flattened pe tile, broadcast over batch
    o_ref[...] = (x_ref[...] + pe_ref[...]).astype(o_ref.dtype)


def _round_up(x: int, m: int) -> int:
    return (x + m - 1) // m * m


class PositionEmbedding:
    """Sinusoidal position embedding; forward adds pe[:seq] to x via Pallas."""

    # Budget for the *padded* VMEM footprint of all double-buffered blocks.
    # 12 MiB leaves headroom under v5e's 16 MiB scoped-VMEM default.
    _VMEM_BUDGET_BYTES = 12 * 1024 * 1024

    def __init__(self, d_model: int, max_len: int = 5000) -> None:
        assert d_model % 2 == 0, "d_model must be even (same constraint as torch ref)"
        self.d_model = d_model
        self.max_len = max_len
        # Deterministic buffer construction (matches torch __init__ semantics).
        position = jnp.arange(max_len, dtype=jnp.float32)[:, None]           # (max_len, 1)
        div_term = jnp.exp(
            jnp.arange(0, d_model, 2, dtype=jnp.float32)
            * (-math.log(10000.0) / d_model)
        )                                                                      # (d_model//2,)
        angles = position * div_term[None, :]                                  # (max_len, d_model//2)
        pe = jnp.zeros((max_len, d_model), dtype=jnp.float32)
        pe = pe.at[:, 0::2].set(jnp.sin(angles))
        pe = pe.at[:, 1::2].set(jnp.cos(angles))
        self.pe = pe                                                           # (max_len, d_model) f32 master
        self._pe_cache = {}                                                    # (seq_len, dtype) -> flat pe

    def _pe_flat(self, seq_len: int, dtype) -> jax.Array:
        """pe[:seq_len] flattened to (1, seq_len*d_model) in the compute dtype."""
        key = (seq_len, jnp.dtype(dtype).name)
        cached = self._pe_cache.get(key)
        if cached is None:
            cached = (
                self.pe[:seq_len, :]
                .reshape(1, seq_len * self.d_model)
                .astype(dtype)
            )
            self._pe_cache[key] = cached
        return cached

    def _pick_tile(self, batch: int, flat: int, dtype) -> int:
        """Largest lane-dim tile (multiple of 128) whose padded, double-buffered
        VMEM footprint (x + out + pe) fits the budget."""
        itemsize = jnp.dtype(dtype).itemsize
        # Sublane rounding of a VMEM buffer: f32 -> 8 rows, bf16 -> 16, int8 -> 32.
        sublane = 8 * max(1, 4 // itemsize)
        padded_batch = _round_up(batch, sublane)
        bytes_per_col = itemsize * (
            2 * padded_batch      # x, double-buffered
            + 2 * padded_batch    # out, double-buffered
            + 2 * sublane         # pe (1 row, padded), double-buffered
        )
        max_tile = max(128, (self._VMEM_BUDGET_BYTES // bytes_per_col) // 128 * 128)
        if flat <= max_tile:
            return flat            # single full-extent block (always legal)
        return max_tile            # multiple of 128; ragged last block is masked

    def __call__(self, x: jax.Array) -> jax.Array:
        # x: (batch, seq_len, d_model)
        batch, seq_len, d_model = x.shape
        assert d_model == self.d_model
        assert seq_len <= self.max_len

        flat = seq_len * d_model
        x_flat = x.reshape(batch, flat)                    # lane-dense layout
        pe_flat = self._pe_flat(seq_len, x.dtype)          # (1, flat), x's dtype

        tile_f = self._pick_tile(batch, flat, x.dtype)
        grid_f = pl.cdiv(flat, tile_f)

        out_flat = pl.pallas_call(
            _add_pe_kernel,
            out_shape=jax.ShapeDtypeStruct((batch, flat), x.dtype),
            grid_spec=pltpu.PrefetchScalarGridSpec(
                num_scalar_prefetch=0,
                grid=(grid_f,),
                in_specs=[
                    # x: all batch rows, one flattened-feature tile per step
                    pl.BlockSpec((batch, tile_f), lambda f: (0, f)),
                    # pe: same flattened tile, fetched from HBM once per grid step
                    pl.BlockSpec((1, tile_f), lambda f: (0, f)),
                ],
                out_specs=pl.BlockSpec((batch, tile_f), lambda f: (0, f)),
            ),
            compiler_params=pltpu.CompilerParams(
                dimension_semantics=("parallel",),
            ),
        )(x_flat, pe_flat)
        return out_flat.reshape(batch, seq_len, d_model)


if __name__ == "__main__":
    # --- small shape from the spec's forward: (batch, seq, d_model) ---------
    batch, seq_len, d_model = 2, 8, 32
    key = jax.random.PRNGKey(0)
    x = jax.random.normal(key, (batch, seq_len, d_model), dtype=jnp.float32)

    module = PositionEmbedding(d_model=d_model, max_len=5000)
    y = jax.block_until_ready(module(x))

    y_ref = x + module.pe[:seq_len, :][None, :, :]
    assert y.shape == (batch, seq_len, d_model)
    assert jnp.allclose(y, y_ref, atol=1e-6, rtol=1e-6)

    # --- multi-tile path (grid > 1) in f32, checked against plain JAX -------
    b2, s2, d2 = 2, 1024, 512
    x2 = jax.random.normal(jax.random.PRNGKey(1), (b2, s2, d2), dtype=jnp.float32)
    module2 = PositionEmbedding(d_model=d2, max_len=2048)
    y2 = jax.block_until_ready(module2(x2))
    y2_ref = x2 + module2.pe[:s2, :][None, :, :]
    assert jnp.allclose(y2, y2_ref, atol=1e-6, rtol=1e-6)

    # --- bf16 path (pe streamed in bf16, explicit cast on store) ------------
    x3 = jax.random.normal(jax.random.PRNGKey(2), (2, 16, 32), dtype=jnp.bfloat16)
    y3 = jax.block_until_ready(module(x3))
    y3_ref = x3 + module.pe[:16, :][None, :, :].astype(jnp.bfloat16)
    assert jnp.allclose(
        y3.astype(jnp.float32), y3_ref.astype(jnp.float32), atol=1e-2, rtol=1e-2
    )

    print("KERNEL_OK")
</pallas_src>

<mosaic_0001>
module attributes {stable_mosaic.version = 11 : i64} {
  func.func @_add_pe_kernel(%arg0: i32, %arg1: memref<2x256xf32, #tpu.memory_space<vmem>>, %arg2: memref<1x256xf32, #tpu.memory_space<vmem>>, %arg3: memref<2x256xf32, #tpu.memory_space<vmem>>) attributes {dimension_semantics = [#tpu.dimension_semantics<parallel>], iteration_bounds = array<i64: 1>, scalar_prefetch = 0 : i64, scratch_operands = 0 : i64, tpu.core_type = #tpu.core_type<tc>, window_params = [{transform_indices = @transform_0, window_bounds = array<i64: 2, 256>}, {transform_indices = @transform_1, window_bounds = array<i64: 1, 256>}, {transform_indices = @transform_2, window_bounds = array<i64: 2, 256>}]} {
    %c0 = arith.constant 0 : index
    %c0_0 = arith.constant 0 : index
    %0 = vector.load %arg1[%c0, %c0_0] : memref<2x256xf32, #tpu.memory_space<vmem>>, vector<2x256xf32>
    %c0_1 = arith.constant 0 : index
    %c0_2 = arith.constant 0 : index
    %1 = vector.load %arg2[%c0_1, %c0_2] : memref<1x256xf32, #tpu.memory_space<vmem>>, vector<1x256xf32>
    %2 = vector.broadcast %1 : vector<1x256xf32> to vector<2x256xf32>
    %3 = arith.addf %0, %2 : vector<2x256xf32>
    %c0_3 = arith.constant 0 : index
    %c0_4 = arith.constant 0 : index
    %4 = vector.load %arg3[%c0_3, %c0_4] : memref<2x256xf32, #tpu.memory_space<vmem>>, vector<2x256xf32>
    tpu.vector_store %arg3[%c0_3, %c0_4], %3 {strides = array<i32>} : memref<2x256xf32, #tpu.memory_space<vmem>>, vector<2x256xf32>,
    return
  }
  func.func @transform_0(%arg0: i32) -> (i32, i32) {
    %c0_i32 = arith.constant 0 : i32
    %c0_i32_0 = arith.constant 0 : i32
    return %c0_i32, %arg0 : i32, i32
  }
  func.func @transform_1(%arg0: i32) -> (i32, i32) {
    %c0_i32 = arith.constant 0 : i32
    %c0_i32_0 = arith.constant 0 : i32
    return %c0_i32, %arg0 : i32, i32
  }
  func.func @transform_2(%arg0: i32) -> (i32, i32) {
    %c0_i32 = arith.constant 0 : i32
    %c0_i32_0 = arith.constant 0 : i32
    return %c0_i32, %arg0 : i32, i32
  }
}

</mosaic_0001>

<llo_original>
// kernel: tpu_custom_call.1
$region0: #{tpu_custom_call.1}
  #allocation0 [shape = 'u32[]', space=smem, size = 0x4, offset = 0x4, fixed_abs, tag = 'smem constant byte address 0x4 - core index']
  #allocation1 [shape = 'u32[72,128]{1,0:T(1,128)}', space=vmem, size = 0x9000, scoped, tag = 'internal scratch']
  %s0 = inlined_call_operand.hbm [shape: f32[2,256], index: 0, kind: input, shape index: {}]
  %s1 = inlined_call_operand.hbm [shape: f32[1,256], index: 1, kind: input, shape index: {}]
  %s2 = inlined_call_operand.hbm [shape: f32[2,256], index: 2, kind: output, shape index: {}]
  %s3 = sld [smem:[#allocation0]]
  $region26: #{tpu_custom_call.1} parent=0
    _
  %s5 = ssub.s32 1, %s3
  %s6 = scalar_select 0, %s5, %s3
  $region1: #{tpu_custom_call.1} parent=0
    #allocation2 [shape = 'u8[2048]{0}', space=vmem, size = 0x800, scoped, tag = 'input window, operand 0, single buffered']
    #allocation3 [shape = 's32[1]{0}', space=sflag, size = 0x4, scoped, tag = 'scoped memory for tpu_custom_call.1']
    #allocation4 [shape = 's32[1]{0}', space=sflag, size = 0x4, scoped, tag = 'scoped memory for tpu_custom_call.1']
    #allocation5 [shape = 'u8[1024]{0}', space=vmem, size = 0x400, scoped, tag = 'input window, operand 1, single buffered']
    #allocation6 [shape = 's32[1]{0}', space=sflag, size = 0x4, scoped, tag = 'scoped memory for tpu_custom_call.1']
    #allocation7 [shape = 'u8[2048]{0}', space=vmem, size = 0x800, scoped, tag = 'output window, operand 0, single buffered']
    %7 = vsyncpa [#allocation3], 0
    %8 = vsyncpa [#allocation6], 0
    %9 = vsyncpa [#allocation4], 0
    // Predicated region
    $region2: #{tpu_custom_call.1} parent=1 // pred_check
      _
    $region3: #{tpu_custom_call.1} parent=1 // pred_check_branch
      %11 = sbr.rel (0) target = $region5
    $region4: #{tpu_custom_call.1} parent=1 // pred_region
      %13 = vsyncadd [#allocation3], 0
      %s15 = sshll.u32 %s0, 4
      %s16 = int_to_ptr.hbm [resolvable:$true] %s15
      %s17 = sshll.u32 [#allocation2], 4
      %s18 = int_to_ptr.vmem [resolvable:$true] %s17
      %20 = dma.hbm_to_vmem [thread:$0]  %s16, 64, %s18, [#allocation3]
    $region5: #{tpu_custom_call.1} parent=1 // pred_fallthru
      _
    // Predicated region
    $region6: #{tpu_custom_call.1} parent=1 // pred_check
      _
    $region7: #{tpu_custom_call.1} parent=1 // pred_check_branch
      %22 = sbr.rel (0) target = $region9
    $region8: #{tpu_custom_call.1} parent=1 // pred_region
      %24 = vsyncadd [#allocation6], 0
      %s26 = sshll.u32 %s1, 4
      %s27 = int_to_ptr.hbm [resolvable:$true] %s26
      %s28 = sshll.u32 [#allocation5], 4
      %s29 = int_to_ptr.vmem [resolvable:$true] %s28
      %31 = dma.hbm_to_vmem [thread:$0]  %s27, 32, %s29, [#allocation6]
    $region9: #{tpu_custom_call.1} parent=1 // pred_fallthru
      _
    // Predicated region
    $region10: #{tpu_custom_call.1} parent=1 // pred_check
      _
    $region11: #{tpu_custom_call.1} parent=1 // pred_check_branch
      %33 = sbr.rel (0) target = $region13
    $region12: #{tpu_custom_call.1} parent=1 // pred_region
      %35 = dma.done [#allocation3], 64
    $region13: #{tpu_custom_call.1} parent=1 // pred_fallthru
      _
    // Predicated region
    $region14: #{tpu_custom_call.1} parent=1 // pred_check
      _
    $region15: #{tpu_custom_call.1} parent=1 // pred_check_branch
      %37 = sbr.rel (0) target = $region17
    $region16: #{tpu_custom_call.1} parent=1 // pred_region
      %39 = dma.done [#allocation6], 32
    $region17: #{tpu_custom_call.1} parent=1 // pred_fallthru
      _
    %v40 = vld [vmem:[#allocation2] sm:$0xf]
    %v41 = vld [vmem:[#allocation5] sm:$0x3]
    %v43 = vperm.slane %v41, 0
    %v44 = vperm.slane %v41, 1
    %v45 = vrot.slane %v44, 6
    %vm46 = vcmask 1041408
    %v47 = vsel %vm46, %v43, %v45
    %v49 = vadd.f32 %v40, %v47
    %50 = vst [vmem:[#allocation7] sm:$0xf] %v49
    // Predicated region
    $region18: #{tpu_custom_call.1} parent=1 // pred_check
      _
    $region19: #{tpu_custom_call.1} parent=1 // pred_check_branch
      %52 = sbr.rel (0) target = $region21
    $region20: #{tpu_custom_call.1} parent=1 // pred_region
      %54 = vsyncadd [#allocation4], 0
      %s56 = sshll.u32 [#allocation7], 4
      %s57 = int_to_ptr.vmem [resolvable:$true] %s56
      %s58 = sshll.u32 %s2, 4
      %s59 = int_to_ptr.hbm [resolvable:$true] %s58
      %61 = dma.vmem_to_hbm [thread:$0]  %s57, 64, %s59, [#allocation4]
    $region21: #{tpu_custom_call.1} parent=1 // pred_fallthru
      _
    // Predicated region
    $region22: #{tpu_custom_call.1} parent=1 // pred_check
      _
    $region23: #{tpu_custom_call.1} parent=1 // pred_check_branch
      %63 = sbr.rel (0) target = $region25
    $region24: #{tpu_custom_call.1} parent=1 // pred_region
      %65 = dma.done [#allocation4], 64
    $region25: #{tpu_custom_call.1} parent=1 // pred_fallthru
      _
    %66 = vsyncpa [#allocation3], 1
    %67 = vsyncpa [#allocation6], 1
    %68 = vsyncpa [#allocation4], 1

</llo_original>
